<compile_context>
chip_gen: v5e
topology: v5e:2x2
jax: 0.10.0
libtpu: 0.0.40
codegen_flags: <defaults>
</compile_context>

<pallas_src>
import jax
import jax.numpy as jnp
from jax.experimental import pallas as pl
from jax.experimental.pallas import tpu as pltpu

Q_IN = 4        # quantum input features
Q_OUT = 8       # quantum layer output features
BERT_DIM = 768  # BERT embedding dim
HIDDEN = 256    # classifier hidden dim
N_CLASSES = 3   # output classes
OUT_PAD = 128   # layer-2 weight lane padding (VMEM only; HBM output stays 3)


def _round_up(x, m):
    return (x + m - 1) // m * m


def _pick_tile_b(batch):
    """Largest tile in {1024..16} with <=10% batch-padding waste; if that
    yields a single grid step, halve it so both v7x TensorCores get work."""
    candidates = (1024, 512, 256, 128, 64, 32, 16)
    tile = 16
    for t in candidates:
        b_pad = _round_up(batch, t)
        if (b_pad - batch) * 10 <= b_pad:          # <= 10% padded rows
            tile = t
            break
    if _round_up(batch, tile) // tile < 2 and tile > 16:
        tile //= 2                                  # >= 2 grid steps when possible
    return tile


def _hybrid_kernel(q_ref, bert_ref, w1q_ref, w1b_ref, b1_ref,
                   w2_ref, b2_ref, out_ref):
    # Layer 1, bert path (dominant traffic/compute): MXU, f32 accumulation.
    acc = jnp.dot(bert_ref[...], w1b_ref[...],
                  preferred_element_type=jnp.float32)
    acc = acc + b1_ref[...]

    # Layer 1, quantum path. The quantum layer is already folded into
    # w1q/b1 by the wrapper; the K=4 contraction is 4 broadcast-FMAs on the
    # VPU (no MXU pass, no HBM-level zero padding).
    q = q_ref[...]          # [tile_b, 4] f32
    w1q = w1q_ref[...]      # [4, 256]    f32
    for k in range(Q_IN):                       # unrolled at trace time
        acc = acc + q[:, k:k + 1] * w1q[k:k + 1, :]

    h = jnp.maximum(acc, 0.0).astype(jnp.bfloat16)

    # Layer 2: [tile_b,256] @ [256,128] (w2 lane-padded inside VMEM only),
    # then store just the 3 real logit columns (HBM output is [b_pad, 3]).
    out = jnp.dot(h, w2_ref[...], preferred_element_type=jnp.float32)
    out = out + b2_ref[...]
    out_ref[...] = out[:, :N_CLASSES].astype(out_ref.dtype)


def hybrid_type_model(quantum_input, bert_input, params):
    """Full HybridTypeModel forward via one batch-tiled Pallas kernel.

    quantum_input: [B, 4]   float32
    bert_input   : [B, 768] float32
    params: dict with wq[4,8], bq[1,8], w1q[8,256], w1b[768,256], b1[1,256],
            w2[256,3], b2[1,3]
    returns: [B, 3] float32 logits
    """
    B = quantum_input.shape[0]
    f32, bf16 = jnp.float32, jnp.bfloat16

    wq = params["wq"].astype(f32)
    bq = params["bq"].astype(f32)
    w1q = params["w1q"].astype(f32)
    w1b = params["w1b"].astype(f32)
    b1 = params["b1"].astype(f32)
    w2 = params["w2"].astype(f32)
    b2 = params["b2"].astype(f32)

    # --- trace-time algebraic fold (exact; pre-ReLU) ------------------------
    #   relu((q @ wq + bq) @ w1q + bert @ w1b + b1)
    # = relu(q @ (wq @ w1q) + bert @ w1b + (b1 + bq @ w1q))
    w1q_fused = wq @ w1q                         # [4, 256] f32 (VPU path)
    b1_fused = b1 + bq @ w1q                     # [1, 256] f32

    # Layer-2 weight lane-padded 3 -> 128 inside VMEM only (64 KiB resident);
    # the HBM output itself stays [b_pad, 3].
    w2_pad = jnp.zeros((HIDDEN, OUT_PAD), f32).at[:, :N_CLASSES].set(w2)
    b2_pad = jnp.zeros((1, OUT_PAD), f32).at[:, :N_CLASSES].set(b2)

    # bf16 on MXU operands (f32 accumulation in-kernel); biases stay f32.
    w1b_b = w1b.astype(bf16)
    w2_b = w2_pad.astype(bf16)

    # --- batch tiling --------------------------------------------------------
    tile_b = _pick_tile_b(B)
    b_pad = _round_up(B, tile_b)

    # Single bf16 cast of bert (halves the dominant DMA); pad rows only when
    # the batch is not already tile-aligned (no unconditional copy pass).
    bert = bert_input.astype(bf16)
    q_in = quantum_input.astype(f32)             # [B, 4]; tiny, stays f32
    if b_pad != B:
        pad = b_pad - B
        bert = jnp.pad(bert, ((0, pad), (0, 0)))
        q_in = jnp.pad(q_in, ((0, pad), (0, 0)))

    grid = (b_pad // tile_b,)

    out = pl.pallas_call(
        _hybrid_kernel,
        out_shape=jax.ShapeDtypeStruct((b_pad, N_CLASSES), f32),
        grid=grid,
        in_specs=[
            # batch-tiled activations
            pl.BlockSpec((tile_b, Q_IN), lambda i: (i, 0),
                         memory_space=pltpu.VMEM),
            pl.BlockSpec((tile_b, BERT_DIM), lambda i: (i, 0),
                         memory_space=pltpu.VMEM),
            # weights / biases: constant index_map -> fetched once, resident
            # across grid steps (Pallas skips re-DMA on an unchanged block).
            pl.BlockSpec((Q_IN, HIDDEN), lambda i: (0, 0),
                         memory_space=pltpu.VMEM),
            pl.BlockSpec((BERT_DIM, HIDDEN), lambda i: (0, 0),
                         memory_space=pltpu.VMEM),
            pl.BlockSpec((1, HIDDEN), lambda i: (0, 0),
                         memory_space=pltpu.VMEM),
            pl.BlockSpec((HIDDEN, OUT_PAD), lambda i: (0, 0),
                         memory_space=pltpu.VMEM),
            pl.BlockSpec((1, OUT_PAD), lambda i: (0, 0),
                         memory_space=pltpu.VMEM),
        ],
        out_specs=pl.BlockSpec((tile_b, N_CLASSES), lambda i: (i, 0),
                               memory_space=pltpu.VMEM),
        compiler_params=pltpu.CompilerParams(
            # batch tiles are independent -> megacore sharding on v7x
            dimension_semantics=("parallel",),
            # explicit cap keeps the kernel portable to v7x/v5e scoped VMEM
            vmem_limit_bytes=32 * 1024 * 1024,
        ),
    )(q_in, bert, w1q_fused, w1b_b, b1_fused, w2_b, b2_pad)

    return out if b_pad == B else out[:B]


def init_params(key):
    """Deterministic synthetic parameters (shapes from the module __init__)."""
    ks = jax.random.split(key, 7)
    scale = 0.02
    return {
        # QuantumLayer(4, 8) modeled as affine map
        "wq":  scale * jax.random.normal(ks[0], (Q_IN, Q_OUT), jnp.float32),
        "bq":  scale * jax.random.normal(ks[1], (1, Q_OUT), jnp.float32),
        # Linear(8 + 768, 256) split into q-feature rows and bert rows
        "w1q": scale * jax.random.normal(ks[2], (Q_OUT, HIDDEN), jnp.float32),
        "w1b": scale * jax.random.normal(ks[3], (BERT_DIM, HIDDEN), jnp.float32),
        "b1":  scale * jax.random.normal(ks[4], (1, HIDDEN), jnp.float32),
        # Linear(256, 3)
        "w2":  scale * jax.random.normal(ks[5], (HIDDEN, N_CLASSES), jnp.float32),
        "b2":  scale * jax.random.normal(ks[6], (1, N_CLASSES), jnp.float32),
    }


def _reference(quantum_input, bert_input, params):
    """Pure-JAX f32 reference of the same forward (unfolded, with concat)."""
    q_feat = quantum_input @ params["wq"] + params["bq"]
    combined = jnp.concatenate([q_feat, bert_input], axis=1)
    w1 = jnp.concatenate([params["w1q"], params["w1b"]], axis=0)
    h = jnp.maximum(combined @ w1 + params["b1"], 0.0)
    return h @ params["w2"] + params["b2"]


if __name__ == "__main__":
    key = jax.random.PRNGKey(0)
    k_param, k_q, k_b = jax.random.split(key, 3)

    params = init_params(k_param)
    fwd = jax.jit(hybrid_type_model)

    # Case 1: small batch (single grid step, padded batch rows).
    B = 8
    quantum_input = jax.random.normal(k_q, (B, Q_IN), jnp.float32)
    bert_input = jax.random.normal(k_b, (B, BERT_DIM), jnp.float32)
    out = jax.block_until_ready(fwd(quantum_input, bert_input, params))
    ref = _reference(quantum_input, bert_input, params)
    assert out.shape == (B, N_CLASSES)
    # bf16 MXU operands with f32 accumulation -> compare at bf16-level tol.
    assert jnp.allclose(out, ref, atol=2e-2, rtol=2e-2), "mismatch (B=8)"

    # Case 2: non-aligned batch exercising the multi-step (>=2) grid path.
    B2 = 40
    q2 = jax.random.normal(jax.random.PRNGKey(1), (B2, Q_IN), jnp.float32)
    b2_in = jax.random.normal(jax.random.PRNGKey(2), (B2, BERT_DIM), jnp.float32)
    out2 = jax.block_until_ready(fwd(q2, b2_in, params))
    ref2 = _reference(q2, b2_in, params)
    assert out2.shape == (B2, N_CLASSES)
    assert jnp.allclose(out2, ref2, atol=2e-2, rtol=2e-2), "mismatch (B=40)"

    print("KERNEL_OK")
</pallas_src>

<mosaic_0001>
module attributes {stable_mosaic.version = 11 : i64} {
  func.func @_hybrid_kernel(%arg0: i32, %arg1: memref<16x4xf32, #tpu.memory_space<vmem>>, %arg2: memref<16x768xbf16, #tpu.memory_space<vmem>>, %arg3: memref<4x256xf32, #tpu.memory_space<vmem>>, %arg4: memref<768x256xbf16, #tpu.memory_space<vmem>>, %arg5: memref<1x256xf32, #tpu.memory_space<vmem>>, %arg6: memref<256x128xbf16, #tpu.memory_space<vmem>>, %arg7: memref<1x128xf32, #tpu.memory_space<vmem>>, %arg8: memref<16x3xf32, #tpu.memory_space<vmem>>) attributes {dimension_semantics = [#tpu.dimension_semantics<parallel>], iteration_bounds = array<i64: 1>, scalar_prefetch = 0 : i64, scratch_operands = 0 : i64, tpu.core_type = #tpu.core_type<tc>, window_params = [{transform_indices = @transform_0, window_bounds = array<i64: 16, 4>}, {transform_indices = @transform_1, window_bounds = array<i64: 16, 768>}, {pipeline_mode = #tpu.pipeline_mode<synchronous>, transform_indices = @transform_2, window_bounds = array<i64: 4, 256>}, {pipeline_mode = #tpu.pipeline_mode<synchronous>, transform_indices = @transform_3, window_bounds = array<i64: 768, 256>}, {pipeline_mode = #tpu.pipeline_mode<synchronous>, transform_indices = @transform_4, window_bounds = array<i64: 1, 256>}, {pipeline_mode = #tpu.pipeline_mode<synchronous>, transform_indices = @transform_5, window_bounds = array<i64: 256, 128>}, {pipeline_mode = #tpu.pipeline_mode<synchronous>, transform_indices = @transform_6, window_bounds = array<i64: 1, 128>}, {transform_indices = @transform_7, window_bounds = array<i64: 16, 3>}]} {
    %c0 = arith.constant 0 : index
    %c0_0 = arith.constant 0 : index
    %0 = vector.load %arg2[%c0, %c0_0] : memref<16x768xbf16, #tpu.memory_space<vmem>>, vector<16x768xbf16>
    %c0_1 = arith.constant 0 : index
    %c0_2 = arith.constant 0 : index
    %1 = vector.load %arg4[%c0_1, %c0_2] : memref<768x256xbf16, #tpu.memory_space<vmem>>, vector<768x256xbf16>
    %cst = arith.constant dense<0.000000e+00> : vector<16x256xf32>
    %2 = tpu.matmul %0, %1, %cst {dimension_numbers = #tpu.dot_dimension_numbers<[1], [0], [0], [1], [0, 0, 1, 1], [], []>} : vector<16x768xbf16>, vector<768x256xbf16>, vector<16x256xf32> -> vector<16x256xf32>
    %c0_3 = arith.constant 0 : index
    %c0_4 = arith.constant 0 : index
    %3 = vector.load %arg5[%c0_3, %c0_4] : memref<1x256xf32, #tpu.memory_space<vmem>>, vector<1x256xf32>
    %4 = vector.broadcast %3 : vector<1x256xf32> to vector<16x256xf32>
    %5 = arith.addf %2, %4 : vector<16x256xf32>
    %c0_5 = arith.constant 0 : index
    %c0_6 = arith.constant 0 : index
    %6 = vector.load %arg1[%c0_5, %c0_6] : memref<16x4xf32, #tpu.memory_space<vmem>>, vector<16x4xf32>
    %c0_7 = arith.constant 0 : index
    %c0_8 = arith.constant 0 : index
    %7 = vector.load %arg3[%c0_7, %c0_8] : memref<4x256xf32, #tpu.memory_space<vmem>>, vector<4x256xf32>
    %8 = vector.extract_strided_slice %6 {offsets = [0, 0], sizes = [16, 1], strides = [1, 1]} : vector<16x4xf32> to vector<16x1xf32>
    %9 = vector.extract_strided_slice %7 {offsets = [0, 0], sizes = [1, 256], strides = [1, 1]} : vector<4x256xf32> to vector<1x256xf32>
    %10 = vector.broadcast %8 : vector<16x1xf32> to vector<16x256xf32>
    %11 = vector.broadcast %9 : vector<1x256xf32> to vector<16x256xf32>
    %12 = arith.mulf %10, %11 : vector<16x256xf32>
    %13 = arith.addf %5, %12 : vector<16x256xf32>
    %14 = vector.extract_strided_slice %6 {offsets = [0, 1], sizes = [16, 1], strides = [1, 1]} : vector<16x4xf32> to vector<16x1xf32>
    %15 = vector.extract_strided_slice %7 {offsets = [1, 0], sizes = [1, 256], strides = [1, 1]} : vector<4x256xf32> to vector<1x256xf32>
    %16 = vector.broadcast %14 : vector<16x1xf32> to vector<16x256xf32>
    %17 = vector.broadcast %15 : vector<1x256xf32> to vector<16x256xf32>
    %18 = arith.mulf %16, %17 : vector<16x256xf32>
    %19 = arith.addf %13, %18 : vector<16x256xf32>
    %20 = vector.extract_strided_slice %6 {offsets = [0, 2], sizes = [16, 1], strides = [1, 1]} : vector<16x4xf32> to vector<16x1xf32>
    %21 = vector.extract_strided_slice %7 {offsets = [2, 0], sizes = [1, 256], strides = [1, 1]} : vector<4x256xf32> to vector<1x256xf32>
    %22 = vector.broadcast %20 : vector<16x1xf32> to vector<16x256xf32>
    %23 = vector.broadcast %21 : vector<1x256xf32> to vector<16x256xf32>
    %24 = arith.mulf %22, %23 : vector<16x256xf32>
    %25 = arith.addf %19, %24 : vector<16x256xf32>
    %26 = vector.extract_strided_slice %6 {offsets = [0, 3], sizes = [16, 1], strides = [1, 1]} : vector<16x4xf32> to vector<16x1xf32>
    %27 = vector.extract_strided_slice %7 {offsets = [3, 0], sizes = [1, 256], strides = [1, 1]} : vector<4x256xf32> to vector<1x256xf32>
    %28 = vector.broadcast %26 : vector<16x1xf32> to vector<16x256xf32>
    %29 = vector.broadcast %27 : vector<1x256xf32> to vector<16x256xf32>
    %30 = arith.mulf %28, %29 : vector<16x256xf32>
    %31 = arith.addf %25, %30 : vector<16x256xf32>
    %cst_9 = arith.constant 0.000000e+00 : f32
    %32 = vector.broadcast %cst_9 : f32 to vector<16x256xf32>
    %33 = arith.maximumf %31, %32 : vector<16x256xf32>
    %34 = arith.truncf %33 : vector<16x256xf32> to vector<16x256xbf16>
    %c0_10 = arith.constant 0 : index
    %c0_11 = arith.constant 0 : index
    %35 = vector.load %arg6[%c0_10, %c0_11] : memref<256x128xbf16, #tpu.memory_space<vmem>>, vector<256x128xbf16>
    %cst_12 = arith.constant dense<0.000000e+00> : vector<16x128xf32>
    %36 = tpu.matmul %34, %35, %cst_12 {dimension_numbers = #tpu.dot_dimension_numbers<[1], [0], [0], [1], [0, 0, 1, 1], [], []>} : vector<16x256xbf16>, vector<256x128xbf16>, vector<16x128xf32> -> vector<16x128xf32>
    %c0_13 = arith.constant 0 : index
    %c0_14 = arith.constant 0 : index
    %37 = vector.load %arg7[%c0_13, %c0_14] : memref<1x128xf32, #tpu.memory_space<vmem>>, vector<1x128xf32>
    %38 = vector.broadcast %37 : vector<1x128xf32> to vector<16x128xf32>
    %39 = arith.addf %36, %38 : vector<16x128xf32>
    %40 = vector.extract_strided_slice %39 {offsets = [0, 0], sizes = [16, 3], strides = [1, 1]} : vector<16x128xf32> to vector<16x3xf32>
    %c0_15 = arith.constant 0 : index
    %c0_16 = arith.constant 0 : index
    %41 = vector.load %arg8[%c0_15, %c0_16] : memref<16x3xf32, #tpu.memory_space<vmem>>, vector<16x3xf32>
    tpu.vector_store %arg8[%c0_15, %c0_16], %40 {strides = array<i32>} : memref<16x3xf32, #tpu.memory_space<vmem>>, vector<16x3xf32>,
    return
  }
  func.func @transform_0(%arg0: i32) -> (i32, i32) {
    %c0_i32 = arith.constant 0 : i32
    %c0_i32_0 = arith.constant 0 : i32
    return %arg0, %c0_i32 : i32, i32
  }
  func.func @transform_1(%arg0: i32) -> (i32, i32) {
    %c0_i32 = arith.constant 0 : i32
    %c0_i32_0 = arith.constant 0 : i32
    return %arg0, %c0_i32 : i32, i32
  }
  func.func @transform_2(%arg0: i32) -> (i32, i32) {
    %c0_i32 = arith.constant 0 : i32
    %c0_i32_0 = arith.constant 0 : i32
    %c0_i32_1 = arith.constant 0 : i32
    return %c0_i32, %c0_i32_0 : i32, i32
  }
  func.func @transform_3(%arg0: i32) -> (i32, i32) {
    %c0_i32 = arith.constant 0 : i32
    %c0_i32_0 = arith.constant 0 : i32
    %c0_i32_1 = arith.constant 0 : i32
    return %c0_i32, %c0_i32_0 : i32, i32
  }
  func.func @transform_4(%arg0: i32) -> (i32, i32) {
    %c0_i32 = arith.constant 0 : i32
    %c0_i32_0 = arith.constant 0 : i32
    %c0_i32_1 = arith.constant 0 : i32
    return %c0_i32, %c0_i32_0 : i32, i32
  }
  func.func @transform_5(%arg0: i32) -> (i32, i32) {
    %c0_i32 = arith.constant 0 : i32
    %c0_i32_0 = arith.constant 0 : i32
    %c0_i32_1 = arith.constant 0 : i32
    return %c0_i32, %c0_i32_0 : i32, i32
  }
  func.func @transform_6(%arg0: i32) -> (i32, i32) {
    %c0_i32 = arith.constant 0 : i32
    %c0_i32_0 = arith.constant 0 : i32
    %c0_i32_1 = arith.constant 0 : i32
    return %c0_i32, %c0_i32_0 : i32, i32
  }
  func.func @transform_7(%arg0: i32) -> (i32, i32) {
    %c0_i32 = arith.constant 0 : i32
    %c0_i32_0 = arith.constant 0 : i32
    return %arg0, %c0_i32 : i32, i32
  }
}

</mosaic_0001>

<llo_original>
// kernel: hybrid_type_model.1
$region0: #{hybrid_type_model.1}
  #allocation0 [shape = 'u32[]', space=smem, size = 0x4, offset = 0x4, fixed_abs, tag = 'smem constant byte address 0x4 - core index']
  #allocation1 [shape = 'u32[72,128]{1,0:T(1,128)}', space=vmem, size = 0x9000, scoped, tag = 'internal scratch']
  %s0 = inlined_call_operand.vmem [shape: f32[16,4], index: 0, kind: input, shape index: {}]
  %s1 = inlined_call_operand.vmem [shape: bf16[16,768], index: 1, kind: input, shape index: {}]
  %s2 = inlined_call_operand.vmem [shape: f32[4,256], index: 2, kind: input, shape index: {}]
  %s3 = inlined_call_operand.vmem [shape: bf16[768,256], index: 3, kind: input, shape index: {}]
  %s4 = inlined_call_operand.vmem [shape: f32[1,256], index: 4, kind: input, shape index: {}]
  %s5 = inlined_call_operand.vmem [shape: bf16[256,128], index: 5, kind: input, shape index: {}]
  %s6 = inlined_call_operand.vmem [shape: f32[1,128], index: 6, kind: input, shape index: {}]
  %s7 = inlined_call_operand.vmem [shape: f32[16,3], index: 7, kind: output, shape index: {}]
  %s8 = sld [smem:[#allocation0]]
  $region38: #{hybrid_type_model.1} parent=0
    _
  %s10 = ssub.s32 1, %s8
  %s11 = scalar_select 0, %s10, %s8
  // Predicated region
  $region2: #{hybrid_type_model.1} parent=0 // pred_check
    _
  $region3: #{hybrid_type_model.1} parent=0 // pred_check_branch
    %13 = sbr.rel (0) target = $region5
  $region4: #{hybrid_type_model.1} parent=0 // pred_region
    _
  $region5: #{hybrid_type_model.1} parent=0 // pred_fallthru
    _
  // Predicated region
  $region6: #{hybrid_type_model.1} parent=0 // pred_check
    _
  $region7: #{hybrid_type_model.1} parent=0 // pred_check_branch
    %15 = sbr.rel (0) target = $region9
  $region8: #{hybrid_type_model.1} parent=0 // pred_region
    _
  $region9: #{hybrid_type_model.1} parent=0 // pred_fallthru
    _
  // Predicated region
  $region10: #{hybrid_type_model.1} parent=0 // pred_check
    _
  $region11: #{hybrid_type_model.1} parent=0 // pred_check_branch
    %17 = sbr.rel (0) target = $region13
  $region12: #{hybrid_type_model.1} parent=0 // pred_region
    _
  $region13: #{hybrid_type_model.1} parent=0 // pred_fallthru
    _
  // Predicated region
  $region14: #{hybrid_type_model.1} parent=0 // pred_check
    _
  $region15: #{hybrid_type_model.1} parent=0 // pred_check_branch
    %19 = sbr.rel (0) target = $region17
  $region16: #{hybrid_type_model.1} parent=0 // pred_region
    _
  $region17: #{hybrid_type_model.1} parent=0 // pred_fallthru
    _
  // Predicated region
  $region18: #{hybrid_type_model.1} parent=0 // pred_check
    _
  $region19: #{hybrid_type_model.1} parent=0 // pred_check_branch
    %21 = sbr.rel (0) target = $region21
  $region20: #{hybrid_type_model.1} parent=0 // pred_region
    _
  $region21: #{hybrid_type_model.1} parent=0 // pred_fallthru
    _
  // Predicated region
  $region22: #{hybrid_type_model.1} parent=0 // pred_check
    _
  $region23: #{hybrid_type_model.1} parent=0 // pred_check_branch
    %23 = sbr.rel (0) target = $region25
  $region24: #{hybrid_type_model.1} parent=0 // pred_region
    _
  $region25: #{hybrid_type_model.1} parent=0 // pred_fallthru
    _
  // Predicated region
  $region26: #{hybrid_type_model.1} parent=0 // pred_check
    _
  $region27: #{hybrid_type_model.1} parent=0 // pred_check_branch
    %25 = sbr.rel (0) target = $region29
  $region28: #{hybrid_type_model.1} parent=0 // pred_region
    _
  $region29: #{hybrid_type_model.1} parent=0 // pred_fallthru
    _
  %v26 = vld [vmem:[%s1] sm:$0xff]
  %v27 = vld [vmem:[%s1 + $0x8] sm:$0xff]
  %v28 = vld [vmem:[%s1 + $0x10] sm:$0xff]
  %v29 = vld [vmem:[%s1 + $0x18] sm:$0xff]
  %v30 = vld [vmem:[%s1 + $0x20] sm:$0xff]
  %v31 = vld [vmem:[%s1 + $0x28] sm:$0xff]
  %v32 = vld [vmem:[%s3] sm:$0xff]
  %v33 = vld [vmem:[%s3 + $0x8] sm:$0xff]
  %v34 = vld [vmem:[%s3 + $0x10] sm:$0xff]
  %v35 = vld [vmem:[%s3 + $0x18] sm:$0xff]
  %v36 = vld [vmem:[%s3 + $0x20] sm:$0xff]
  %v37 = vld [vmem:[%s3 + $0x28] sm:$0xff]
  %v38 = vld [vmem:[%s3 + $0x30] sm:$0xff]
  %v39 = vld [vmem:[%s3 + $0x38] sm:$0xff]
  %v40 = vld [vmem:[%s3 + $0x40] sm:$0xff]
  %v41 = vld [vmem:[%s3 + $0x48] sm:$0xff]
  %v42 = vld [vmem:[%s3 + $0x50] sm:$0xff]
  %v43 = vld [vmem:[%s3 + $0x58] sm:$0xff]
  %v44 = vld [vmem:[%s3 + $0x60] sm:$0xff]
  %v45 = vld [vmem:[%s3 + $0x68] sm:$0xff]
  %v46 = vld [vmem:[%s3 + $0x70] sm:$0xff]
  %v47 = vld [vmem:[%s3 + $0x78] sm:$0xff]
  %v48 = vld [vmem:[%s3 + $0x80] sm:$0xff]
  %v49 = vld [vmem:[%s3 + $0x88] sm:$0xff]
  %v50 = vld [vmem:[%s3 + $0x90] sm:$0xff]
  %v51 = vld [vmem:[%s3 + $0x98] sm:$0xff]
  %v52 = vld [vmem:[%s3 + $0xa0] sm:$0xff]
  %v53 = vld [vmem:[%s3 + $0xa8] sm:$0xff]
  %v54 = vld [vmem:[%s3 + $0xb0] sm:$0xff]
  %v55 = vld [vmem:[%s3 + $0xb8] sm:$0xff]
  %v56 = vld [vmem:[%s3 + $0xc0] sm:$0xff]
  %v57 = vld [vmem:[%s3 + $0xc8] sm:$0xff]
  %v58 = vld [vmem:[%s3 + $0xd0] sm:$0xff]
  %v59 = vld [vmem:[%s3 + $0xd8] sm:$0xff]
  %v60 = vld [vmem:[%s3 + $0xe0] sm:$0xff]
  %v61 = vld [vmem:[%s3 + $0xe8] sm:$0xff]
  %v62 = vld [vmem:[%s3 + $0xf0] sm:$0xff]
  %v63 = vld [vmem:[%s3 + $0xf8] sm:$0xff]
  %v64 = vld [vmem:[%s3 + $0x100] sm:$0xff]
  %v65 = vld [vmem:[%s3 + $0x108] sm:$0xff]
  %v66 = vld [vmem:[%s3 + $0x110] sm:$0xff]
  %v67 = vld [vmem:[%s3 + $0x118] sm:$0xff]
  %v68 = vld [vmem:[%s3 + $0x120] sm:$0xff]
  %v69 = vld [vmem:[%s3 + $0x128] sm:$0xff]
  %v70 = vld [vmem:[%s3 + $0x130] sm:$0xff]
  %v71 = vld [vmem:[%s3 + $0x138] sm:$0xff]
  %v72 = vld [vmem:[%s3 + $0x140] sm:$0xff]
  %v73 = vld [vmem:[%s3 + $0x148] sm:$0xff]
  %v74 = vld [vmem:[%s3 + $0x150] sm:$0xff]
  %v75 = vld [vmem:[%s3 + $0x158] sm:$0xff]
  %v76 = vld [vmem:[%s3 + $0x160] sm:$0xff]
  %v77 = vld [vmem:[%s3 + $0x168] sm:$0xff]
  %v78 = vld [vmem:[%s3 + $0x170] sm:$0xff]
  %v79 = vld [vmem:[%s3 + $0x178] sm:$0xff]
  %v80 = vld [vmem:[%s3 + $0x180] sm:$0xff]
  %v81 = vld [vmem:[%s3 + $0x188] sm:$0xff]
  %v82 = vld [vmem:[%s3 + $0x190] sm:$0xff]
  %v83 = vld [vmem:[%s3 + $0x198] sm:$0xff]
  %v84 = vld [vmem:[%s3 + $0x1a0] sm:$0xff]
  %v85 = vld [vmem:[%s3 + $0x1a8] sm:$0xff]
  %v86 = vld [vmem:[%s3 + $0x1b0] sm:$0xff]
  %v87 = vld [vmem:[%s3 + $0x1b8] sm:$0xff]
  %v88 = vld [vmem:[%s3 + $0x1c0] sm:$0xff]
  %v89 = vld [vmem:[%s3 + $0x1c8] sm:$0xff]
  %v90 = vld [vmem:[%s3 + $0x1d0] sm:$0xff]
  %v91 = vld [vmem:[%s3 + $0x1d8] sm:$0xff]
  %v92 = vld [vmem:[%s3 + $0x1e0] sm:$0xff]
  %v93 = vld [vmem:[%s3 + $0x1e8] sm:$0xff]
  %v94 = vld [vmem:[%s3 + $0x1f0] sm:$0xff]
  %v95 = vld [vmem:[%s3 + $0x1f8] sm:$0xff]
  %v96 = vld [vmem:[%s3 + $0x200] sm:$0xff]
  %v97 = vld [vmem:[%s3 + $0x208] sm:$0xff]
  %v98 = vld [vmem:[%s3 + $0x210] sm:$0xff]
  %v99 = vld [vmem:[%s3 + $0x218] sm:$0xff]
  %v100 = vld [vmem:[%s3 + $0x220] sm:$0xff]
  %v101 = vld [vmem:[%s3 + $0x228] sm:$0xff]
  %v102 = vld [vmem:[%s3 + $0x230] sm:$0xff]
  %v103 = vld [vmem:[%s3 + $0x238] sm:$0xff]
  %v104 = vld [vmem:[%s3 + $0x240] sm:$0xff]
  %v105 = vld [vmem:[%s3 + $0x248] sm:$0xff]
  %v106 = vld [vmem:[%s3 + $0x250] sm:$0xff]
  %v107 = vld [vmem:[%s3 + $0x258] sm:$0xff]
  %v108 = vld [vmem:[%s3 + $0x260] sm:$0xff]
  %v109 = vld [vmem:[%s3 + $0x268] sm:$0xff]
  %v110 = vld [vmem:[%s3 + $0x270] sm:$0xff]
  %v111 = vld [vmem:[%s3 + $0x278] sm:$0xff]
  %v112 = vld [vmem:[%s3 + $0x280] sm:$0xff]
  %v113 = vld [vmem:[%s3 + $0x288] sm:$0xff]
  %v114 = vld [vmem:[%s3 + $0x290] sm:$0xff]
  %v115 = vld [vmem:[%s3 + $0x298] sm:$0xff]
  %v116 = vld [vmem:[%s3 + $0x2a0] sm:$0xff]
  %v117 = vld [vmem:[%s3 + $0x2a8] sm:$0xff]
  %v118 = vld [vmem:[%s3 + $0x2b0] sm:$0xff]
  %v119 = vld [vmem:[%s3 + $0x2b8] sm:$0xff]
  %v120 = vld [vmem:[%s3 + $0x2c0] sm:$0xff]
  %v121 = vld [vmem:[%s3 + $0x2c8] sm:$0xff]
  %v122 = vld [vmem:[%s3 + $0x2d0] sm:$0xff]
  %v123 = vld [vmem:[%s3 + $0x2d8] sm:$0xff]
  %v124 = vld [vmem:[%s3 + $0x2e0] sm:$0xff]
  %v125 = vld [vmem:[%s3 + $0x2e8] sm:$0xff]
  %v126 = vld [vmem:[%s3 + $0x2f0] sm:$0xff]
  %v127 = vld [vmem:[%s3 + $0x2f8] sm:$0xff]
  %v128 = vld [vmem:[%s4] sm:$0x3]
  %v130 = vperm.slane %v128, 0
  %v131 = vperm.slane %v128, 1
  %v140 = vunpack.c.l.b16 %v26
  %v141 = vunpack.c.h.b16 %v26
  %v142 = vunpack.c.l.b16 %v27
  %v143 = vunpack.c.h.b16 %v27
  %v144 = vunpack.c.l.b16 %v28
  %v145 = vunpack.c.h.b16 %v28
  %v146 = vunpack.c.l.b16 %v29
  %v147 = vunpack.c.h.b16 %v29
  %v148 = vunpack.c.l.b16 %v30
  %v149 = vunpack.c.h.b16 %v30
  %v150 = vunpack.c.l.b16 %v31
  %v151 = vunpack.c.h.b16 %v31
  %v152 = vpack.c.b16 %v146, %v140
  %v153 = vpack.c.b16 %v147, %v141
  %v154 = vpack.c.b16 %v148, %v142
  %v155 = vpack.c.b16 %v149, %v143
  %v156 = vpack.c.b16 %v150, %v144
  %v157 = vpack.c.b16 %v151, %v145
  %v260 = vunpack.c.l.b16 %v32
  %v261 = vunpack.c.h.b16 %v32
  %v262 = vunpack.c.l.b16 %v33
  %v263 = vunpack.c.h.b16 %v33
  %v264 = vunpack.c.l.b16 %v34
  %v265 = vunpack.c.h.b16 %v34
  %v266 = vunpack.c.l.b16 %v35
  %v267 = vunpack.c.h.b16 %v35
  %v268 = vunpack.c.l.b16 %v36
  %v269 = vunpack.c.h.b16 %v36
  %v270 = vunpack.c.l.b16 %v37
  %v271 = vunpack.c.h.b16 %v37
  %v272 = vunpack.c.l.b16 %v38
  %v273 = vunpack.c.h.b16 %v38
  %v274 = vunpack.c.l.b16 %v39
  %v275 = vunpack.c.h.b16 %v39
  %v276 = vunpack.c.l.b16 %v40
  %v277 = vunpack.c.h.b16 %v40
  %v278 = vunpack.c.l.b16 %v41
  %v279 = vunpack.c.h.b16 %v41
  %v280 = vunpack.c.l.b16 %v42
  %v281 = vunpack.c.h.b16 %v42
  %v282 = vunpack.c.l.b16 %v43
  %v283 = vunpack.c.h.b16 %v43
  %v284 = vunpack.c.l.b16 %v44
  %v285 = vunpack.c.h.b16 %v44
  %v286 = vunpack.c.l.b16 %v45
  %v287 = vunpack.c.h.b16 %v45
  %v288 = vunpack.c.l.b16 %v46
  %v289 = vunpack.c.h.b16 %v46
  %v290 = vunpack.c.l.b16 %v47
  %v291 = vunpack.c.h.b16 %v47
  %v292 = vunpack.c.l.b16 %v48
  %v293 = vunpack.c.h.b16 %v48
  %v294 = vunpack.c.l.b16 %v49
  %v295 = vunpack.c.h.b16 %v49
  %v296 = vunpack.c.l.b16 %v50
  %v297 = vunpack.c.h.b16 %v50
  %v298 = vunpack.c.l.b16 %v51
  %v299 = vunpack.c.h.b16 %v51
  %v300 = vunpack.c.l.b16 %v52
  %v301 = vunpack.c.h.b16 %v52
  %v302 = vunpack.c.l.b16 %v53
  %v303 = vunpack.c.h.b16 %v53
  %v304 = vunpack.c.l.b16 %v54
  %v305 = vunpack.c.h.b16 %v54
  %v306 = vunpack.c.l.b16 %v55
  %v307 = vunpack.c.h.b16 %v55
  %v308 = vunpack.c.l.b16 %v56
  %v309 = vunpack.c.h.b16 %v56
  %v310 = vunpack.c.l.b16 %v57
  %v311 = vunpack.c.h.b16 %v57
  %v312 = vunpack.c.l.b16 %v58
  %v313 = vunpack.c.h.b16 %v58
  %v314 = vunpack.c.l.b16 %v59
  %v315 = vunpack.c.h.b16 %v59
  %v316 = vunpack.c.l.b16 %v60
  %v317 = vunpack.c.h.b16 %v60
  %v318 = vunpack.c.l.b16 %v61
  %v319 = vunpack.c.h.b16 %v61
  %v320 = vunpack.c.l.b16 %v62
  %v321 = vunpack.c.h.b16 %v62
  %v322 = vunpack.c.l.b16 %v63
  %v323 = vunpack.c.h.b16 %v63
  %v324 = vunpack.c.l.b16 %v64
  %v325 = vunpack.c.h.b16 %v64
  %v326 = vunpack.c.l.b16 %v65
  %v327 = vunpack.c.h.b16 %v65
  %v328 = vunpack.c.l.b16 %v66
  %v329 = vunpack.c.h.b16 %v66
  %v330 = vunpack.c.l.b16 %v67
  %v331 = vunpack.c.h.b16 %v67
  %v332 = vunpack.c.l.b16 %v68
  %v333 = vunpack.c.h.b16 %v68
  %v334 = vunpack.c.l.b16 %v69
  %v335 = vunpack.c.h.b16 %v69
  %v336 = vunpack.c.l.b16 %v70
  %v337 = vunpack.c.h.b16 %v70
  %v338 = vunpack.c.l.b16 %v71
  %v339 = vunpack.c.h.b16 %v71
  %v340 = vunpack.c.l.b16 %v72
  %v341 = vunpack.c.h.b16 %v72
  %v342 = vunpack.c.l.b16 %v73
  %v343 = vunpack.c.h.b16 %v73
  %v344 = vunpack.c.l.b16 %v74
  %v345 = vunpack.c.h.b16 %v74
  %v346 = vunpack.c.l.b16 %v75
  %v347 = vunpack.c.h.b16 %v75
  %v348 = vunpack.c.l.b16 %v76
  %v349 = vunpack.c.h.b16 %v76
  %v350 = vunpack.c.l.b16 %v77
  %v351 = vunpack.c.h.b16 %v77
  %v352 = vunpack.c.l.b16 %v78
  %v353 = vunpack.c.h.b16 %v78
  %v354 = vunpack.c.l.b16 %v79
  %v355 = vunpack.c.h.b16 %v79
  %v356 = vunpack.c.l.b16 %v80
  %v357 = vunpack.c.h.b16 %v80
  %v358 = vunpack.c.l.b16 %v81
  %v359 = vunpack.c.h.b16 %v81
  %v360 = vunpack.c.l.b16 %v82
  %v361 = vunpack.c.h.b16 %v82
  %v362 = vunpack.c.l.b16 %v83
  %v363 = vunpack.c.h.b16 %v83
  %v364 = vunpack.c.l.b16 %v84
  %v365 = vunpack.c.h.b16 %v84
  %v366 = vunpack.c.l.b16 %v85
  %v367 = vunpack.c.h.b16 %v85
  %v368 = vunpack.c.l.b16 %v86
  %v369 = vunpack.c.h.b16 %v86
  %v370 = vunpack.c.l.b16 %v87
  %v371 = vunpack.c.h.b16 %v87
  %v372 = vunpack.c.l.b16 %v88
  %v373 = vunpack.c.h.b16 %v88
  %v374 = vunpack.c.l.b16 %v89
  %v375 = vunpack.c.h.b16 %v89
  %v376 = vunpack.c.l.b16 %v90
  %v377 = vunpack.c.h.b16 %v90
  %v378 = vunpack.c.l.b16 %v91
  %v379 = vunpack.c.h.b16 %v91
  %v380 = vunpack.c.l.b16 %v92
  %v381 = vunpack.c.h.b16 %v92
  %v382 = vunpack.c.l.b16 %v93
  %v383 = vunpack.c.h.b16 %v93
  %v384 = vunpack.c.l.b16 %v94
  %v385 = vunpack.c.h.b16 %v94
  %v386 = vunpack.c.l.b16 %v95
  %v387 = vunpack.c.h.b16 %v95
  %v388 = vunpack.c.l.b16 %v96
  %v389 = vunpack.c.h.b16 %v96
  %v390 = vunpack.c.l.b16 %v97
  %v391 = vunpack.c.h.b16 %v97
  %v392 = vunpack.c.l.b16 %v98
  %v393 = vunpack.c.h.b16 %v98
  %v394 = vunpack.c.l.b16 %v99
  %v395 = vunpack.c.h.b16 %v99
  %v396 = vunpack.c.l.b16 %v100
  %v397 = vunpack.c.h.b16 %v100
  %v398 = vunpack.c.l.b16 %v101
  %v399 = vunpack.c.h.b16 %v101
  %v400 = vunpack.c.l.b16 %v102
  %v401 = vunpack.c.h.b16 %v102
  %v402 = vunpack.c.l.b16 %v103
  %v403 = vunpack.c.h.b16 %v103
  %v404 = vunpack.c.l.b16 %v104
  %v405 = vunpack.c.h.b16 %v104
  %v406 = vunpack.c.l.b16 %v105
  %v407 = vunpack.c.h.b16 %v105
  %v408 = vunpack.c.l.b16 %v106
  %v409 = vunpack.c.h.b16 %v106
  %v410 = vunpack.c.l.b16 %v107
  %v411 = vunpack.c.h.b16 %v107
  %v412 = vunpack.c.l.b16 %v108
  %v413 = vunpack.c.h.b16 %v108
  %v414 = vunpack.c.l.b16 %v109
  %v415 = vunpack.c.h.b16 %v109
  %v416 = vunpack.c.l.b16 %v110
  %v417 = vunpack.c.h.b16 %v110
  %v418 = vunpack.c.l.b16 %v111
  %v419 = vunpack.c.h.b16 %v111
  %v420 = vunpack.c.l.b16 %v112
  %v421 = vunpack.c.h.b16 %v112
  %v422 = vunpack.c.l.b16 %v113
  %v423 = vunpack.c.h.b16 %v113
  %v424 = vunpack.c.l.b16 %v114
  %v425 = vunpack.c.h.b16 %v114
  %v426 = vunpack.c.l.b16 %v115
  %v427 = vunpack.c.h.b16 %v115
  %v428 = vunpack.c.l.b16 %v116
  %v429 = vunpack.c.h.b16 %v116
  %v430 = vunpack.c.l.b16 %v117
  %v431 = vunpack.c.h.b16 %v117
  %v432 = vunpack.c.l.b16 %v118
  %v433 = vunpack.c.h.b16 %v118
  %v434 = vunpack.c.l.b16 %v119
  %v435 = vunpack.c.h.b16 %v119
  %v436 = vunpack.c.l.b16 %v120
  %v437 = vunpack.c.h.b16 %v120
  %v438 = vunpack.c.l.b16 %v121
  %v439 = vunpack.c.h.b16 %v121
  %v440 = vunpack.c.l.b16 %v122
  %v441 = vunpack.c.h.b16 %v122
  %v442 = vunpack.c.l.b16 %v123
  %v443 = vunpack.c.h.b16 %v123
  %v444 = vunpack.c.l.b16 %v124
  %v445 = vunpack.c.h.b16 %v124
  %v446 = vunpack.c.l.b16 %v125
  %v447 = vunpack.c.h.b16 %v125
  %v448 = vunpack.c.l.b16 %v126
  %v449 = vunpack.c.h.b16 %v126
  %v450 = vunpack.c.l.b16 %v127
  %v451 = vunpack.c.h.b16 %v127
  %v452 = vpack.c.b16 %v262, %v260
  %v453 = vpack.c.b16 %v263, %v261
  %v454 = vpack.c.b16 %v266, %v264
  %v455 = vpack.c.b16 %v267, %v265
  %v456 = vpack.c.b16 %v270, %v268
  %v457 = vpack.c.b16 %v271, %v269
  %v458 = vpack.c.b16 %v274, %v272
  %v459 = vpack.c.b16 %v275, %v273
  %v460 = vpack.c.b16 %v278, %v276
  %v461 = vpack.c.b16 %v279, %v277
  %v462 = vpack.c.b16 %v282, %v280
  %v463 = vpack.c.b16 %v283, %v281
  %v464 = vpack.c.b16 %v286, %v284
  %v465 = vpack.c.b16 %v287, %v285
  %v466 = vpack.c.b16 %v290, %v288
  %v467 = vpack.c.b16 %v291, %v289
  %v468 = vpack.c.b16 %v294, %v292
  %v469 = vpack.c.b16 %v295, %v293
  %v470 = vpack.c.b16 %v298, %v296
  %v471 = vpack.c.b16 %v299, %v297
  %v472 = vpack.c.b16 %v302, %v300
  %v473 = vpack.c.b16 %v303, %v301
  %v474 = vpack.c.b16 %v306, %v304
  %v475 = vpack.c.b16 %v307, %v305
  %v476 = vpack.c.b16 %v310, %v308
  %v477 = vpack.c.b16 %v311, %v309
  %v478 = vpack.c.b16 %v314, %v312
  %v479 = vpack.c.b16 %v315, %v313
  %v480 = vpack.c.b16 %v318, %v316
  %v481 = vpack.c.b16 %v319, %v317
  %v482 = vpack.c.b16 %v322, %v320
  %v483 = vpack.c.b16 %v323, %v321
  %v484 = vpack.c.b16 %v326, %v324
  %v485 = vpack.c.b16 %v327, %v325
  %v486 = vpack.c.b16 %v330, %v328
  %v487 = vpack.c.b16 %v331, %v329
  %v488 = vpack.c.b16 %v334, %v332
  %v489 = vpack.c.b16 %v335, %v333
  %v490 = vpack.c.b16 %v338, %v336
  %v491 = vpack.c.b16 %v339, %v337
  %v492 = vpack.c.b16 %v342, %v340
  %v493 = vpack.c.b16 %v343, %v341
  %v494 = vpack.c.b16 %v346, %v344
  %v495 = vpack.c.b16 %v347, %v345
  %v496 = vpack.c.b16 %v350, %v348
  %v497 = vpack.c.b16 %v351, %v349
  %v498 = vpack.c.b16 %v354, %v352
  %v499 = vpack.c.b16 %v355, %v353
  %v500 = vpack.c.b16 %v358, %v356
  %v501 = vpack.c.b16 %v359, %v357
  %v502 = vpack.c.b16 %v362, %v360
  %v503 = vpack.c.b16 %v363, %v361
  %v504 = vpack.c.b16 %v366, %v364
  %v505 = vpack.c.b16 %v367, %v365
  %v506 = vpack.c.b16 %v370, %v368
  %v507 = vpack.c.b16 %v371, %v369
  %v508 = vpack.c.b16 %v374, %v372
  %v509 = vpack.c.b16 %v375, %v373
  %v510 = vpack.c.b16 %v378, %v376
  %v511 = vpack.c.b16 %v379, %v377
  %v512 = vpack.c.b16 %v382, %v380
  %v513 = vpack.c.b16 %v383, %v381
  %v514 = vpack.c.b16 %v386, %v384
  %v515 = vpack.c.b16 %v387, %v385
  %v516 = vpack.c.b16 %v390, %v388
  %v517 = vpack.c.b16 %v391, %v389
  %v518 = vpack.c.b16 %v394, %v392
  %v519 = vpack.c.b16 %v395, %v393
  %v520 = vpack.c.b16 %v398, %v396
  %v521 = vpack.c.b16 %v399, %v397
  %v522 = vpack.c.b16 %v402, %v400
  %v523 = vpack.c.b16 %v403, %v401
  %v524 = vpack.c.b16 %v406, %v404
  %v525 = vpack.c.b16 %v407, %v405
  %v526 = vpack.c.b16 %v410, %v408
  %v527 = vpack.c.b16 %v411, %v409
  %v528 = vpack.c.b16 %v414, %v412
  %v529 = vpack.c.b16 %v415, %v413
  %v530 = vpack.c.b16 %v418, %v416
  %v531 = vpack.c.b16 %v419, %v417
  %v532 = vpack.c.b16 %v422, %v420
  %v533 = vpack.c.b16 %v423, %v421
  %v534 = vpack.c.b16 %v426, %v424
  %v535 = vpack.c.b16 %v427, %v425
  %v536 = vpack.c.b16 %v430, %v428
  %v537 = vpack.c.b16 %v431, %v429
  %v538 = vpack.c.b16 %v434, %v432
  %v539 = vpack.c.b16 %v435, %v433
  %v540 = vpack.c.b16 %v438, %v436
  %v541 = vpack.c.b16 %v439, %v437
  %v542 = vpack.c.b16 %v442, %v440
  %v543 = vpack.c.b16 %v443, %v441
  %v544 = vpack.c.b16 %v446, %v444
  %v545 = vpack.c.b16 %v447, %v445
  %v546 = vpack.c.b16 %v450, %v448
  %v547 = vpack.c.b16 %v451, %v449
  %644 = vmatpush.bf16.msra.mxu0 %v466
  %645 = vmatpush.bf16.msra.mxu0 %v464
  %646 = vmatpush.bf16.msra.mxu0 %v462
  %647 = vmatpush.bf16.msra.mxu0 %v460
  %648 = vmatpush.bf16.msra.mxu0 %v458
  %649 = vmatpush.bf16.msra.mxu0 %v456
  %650 = vmatpush.bf16.msra.mxu0 %v454
  %651 = vmatpush.bf16.msra.mxu0 %v452
  %652 = vmatmul.bf16.gmra.mxu0 %v152
  %v653 = vpop.f32.mrf.mxu0
  %v654 = vadd.f32 %v130, %v653
  %v655 = vpop.f32.mrf.mxu0
  %v656 = vadd.f32 %v130, %v655
  %657 = vdwg.mxu0
  %658 = vmatpush.bf16.msra.mxu0 %v482
  %659 = vmatpush.bf16.msra.mxu0 %v480
  %660 = vmatpush.bf16.msra.mxu0 %v478
  %661 = vmatpush.bf16.msra.mxu0 %v476
  %662 = vmatpush.bf16.msra.mxu0 %v474
  %663 = vmatpush.bf16.msra.mxu0 %v472
  %664 = vmatpush.bf16.msra.mxu0 %v470
  %665 = vmatpush.bf16.msra.mxu0 %v468
  %666 = vmatmul.bf16.gmra.mxu0 %v153
  %v667 = vpop.f32.mrf.mxu0
  %v668 = vadd.f32 %v654, %v667
  %v669 = vpop.f32.mrf.mxu0
  %v670 = vadd.f32 %v656, %v669
  %671 = vdwg.mxu0
  %672 = vmatpush.bf16.msra.mxu0 %v498
  %673 = vmatpush.bf16.msra.mxu0 %v496
  %674 = vmatpush.bf16.msra.mxu0 %v494
  %675 = vmatpush.bf16.msra.mxu0 %v492
  %676 = vmatpush.bf16.msra.mxu0 %v490
  %677 = vmatpush.bf16.msra.mxu0 %v488
  %678 = vmatpush.bf16.msra.mxu0 %v486
  %679 = vmatpush.bf16.msra.mxu0 %v484
  %680 = vmatmul.bf16.gmra.mxu0 %v154
  %v681 = vpop.f32.mrf.mxu0
  %v682 = vadd.f32 %v668, %v681
  %v683 = vpop.f32.mrf.mxu0
  %v684 = vadd.f32 %v670, %v683
  %685 = vdwg.mxu0
  %686 = vmatpush.bf16.msra.mxu0 %v514
  %687 = vmatpush.bf16.msra.mxu0 %v512
  %688 = vmatpush.bf16.msra.mxu0 %v510
  %689 = vmatpush.bf16.msra.mxu0 %v508
  %690 = vmatpush.bf16.msra.mxu0 %v506
  %691 = vmatpush.bf16.msra.mxu0 %v504
  %692 = vmatpush.bf16.msra.mxu0 %v502
  %693 = vmatpush.bf16.msra.mxu0 %v500
  %694 = vmatmul.bf16.gmra.mxu0 %v155
  %v695 = vpop.f32.mrf.mxu0
  %v696 = vadd.f32 %v682, %v695
  %v697 = vpop.f32.mrf.mxu0
  %v698 = vadd.f32 %v684, %v697
  %699 = vdwg.mxu0
  %700 = vmatpush.bf16.msra.mxu0 %v530
  %701 = vmatpush.bf16.msra.mxu0 %v528
  %702 = vmatpush.bf16.msra.mxu0 %v526
  %703 = vmatpush.bf16.msra.mxu0 %v524
  %704 = vmatpush.bf16.msra.mxu0 %v522
  %705 = vmatpush.bf16.msra.mxu0 %v520
  %706 = vmatpush.bf16.msra.mxu0 %v518
  %707 = vmatpush.bf16.msra.mxu0 %v516
  %708 = vmatmul.bf16.gmra.mxu0 %v156
  %v709 = vpop.f32.mrf.mxu0
  %v710 = vadd.f32 %v696, %v709
  %v711 = vpop.f32.mrf.mxu0
  %v712 = vadd.f32 %v698, %v711
  %713 = vdwg.mxu0
  %714 = vmatpush.bf16.msra.mxu0 %v546
  %715 = vmatpush.bf16.msra.mxu0 %v544
  %716 = vmatpush.bf16.msra.mxu0 %v542
  %717 = vmatpush.bf16.msra.mxu0 %v540
  %718 = vmatpush.bf16.msra.mxu0 %v538
  %719 = vmatpush.bf16.msra.mxu0 %v536
  %720 = vmatpush.bf16.msra.mxu0 %v534
  %721 = vmatpush.bf16.msra.mxu0 %v532
  %722 = vmatmul.bf16.gmra.mxu0 %v157
  %v723 = vpop.f32.mrf.mxu0
  %v724 = vadd.f32 %v710, %v723
  %v725 = vpop.f32.mrf.mxu0
  %v726 = vadd.f32 %v712, %v725
  %727 = vdwg.mxu0
  %728 = vmatpush.bf16.msra.mxu0 %v467
  %729 = vmatpush.bf16.msra.mxu0 %v465
  %730 = vmatpush.bf16.msra.mxu0 %v463
  %731 = vmatpush.bf16.msra.mxu0 %v461
  %732 = vmatpush.bf16.msra.mxu0 %v459
  %733 = vmatpush.bf16.msra.mxu0 %v457
  %734 = vmatpush.bf16.msra.mxu0 %v455
  %735 = vmatpush.bf16.msra.mxu0 %v453
  %736 = vmatmul.bf16.gmra.mxu0 %v152
  %v737 = vpop.f32.mrf.mxu0
  %v738 = vadd.f32 %v131, %v737
  %v739 = vpop.f32.mrf.mxu0
  %v740 = vadd.f32 %v131, %v739
  %741 = vdwg.mxu0
  %742 = vmatpush.bf16.msra.mxu0 %v483
  %743 = vmatpush.bf16.msra.mxu0 %v481
  %744 = vmatpush.bf16.msra.mxu0 %v479
  %745 = vmatpush.bf16.msra.mxu0 %v477
  %746 = vmatpush.bf16.msra.mxu0 %v475
  %747 = vmatpush.bf16.msra.mxu0 %v473
  %748 = vmatpush.bf16.msra.mxu0 %v471
  %749 = vmatpush.bf16.msra.mxu0 %v469
  %750 = vmatmul.bf16.gmra.mxu0 %v153
  %v751 = vpop.f32.mrf.mxu0
  %v752 = vadd.f32 %v738, %v751
  %v753 = vpop.f32.mrf.mxu0
  %v754 = vadd.f32 %v740, %v753
  %755 = vdwg.mxu0
  %756 = vmatpush.bf16.msra.mxu0 %v499
  %757 = vmatpush.bf16.msra.mxu0 %v497
  %758 = vmatpush.bf16.msra.mxu0 %v495
  %759 = vmatpush.bf16.msra.mxu0 %v493
  %760 = vmatpush.bf16.msra.mxu0 %v491
  %761 = vmatpush.bf16.msra.mxu0 %v489
  %762 = vmatpush.bf16.msra.mxu0 %v487
  %763 = vmatpush.bf16.msra.mxu0 %v485
  %764 = vmatmul.bf16.gmra.mxu0 %v154
  %v765 = vpop.f32.mrf.mxu0
  %v766 = vadd.f32 %v752, %v765
  %v767 = vpop.f32.mrf.mxu0
  %v768 = vadd.f32 %v754, %v767
  %769 = vdwg.mxu0
  %770 = vmatpush.bf16.msra.mxu0 %v515
  %771 = vmatpush.bf16.msra.mxu0 %v513
  %772 = vmatpush.bf16.msra.mxu0 %v511
  %773 = vmatpush.bf16.msra.mxu0 %v509
  %774 = vmatpush.bf16.msra.mxu0 %v507
  %775 = vmatpush.bf16.msra.mxu0 %v505
  %776 = vmatpush.bf16.msra.mxu0 %v503
  %777 = vmatpush.bf16.msra.mxu0 %v501
  %778 = vmatmul.bf16.gmra.mxu0 %v155
  %v779 = vpop.f32.mrf.mxu0
  %v780 = vadd.f32 %v766, %v779
  %v781 = vpop.f32.mrf.mxu0
  %v782 = vadd.f32 %v768, %v781
  %783 = vdwg.mxu0
  %784 = vmatpush.bf16.msra.mxu0 %v531
  %785 = vmatpush.bf16.msra.mxu0 %v529
  %786 = vmatpush.bf16.msra.mxu0 %v527
  %787 = vmatpush.bf16.msra.mxu0 %v525
  %788 = vmatpush.bf16.msra.mxu0 %v523
  %789 = vmatpush.bf16.msra.mxu0 %v521
  %790 = vmatpush.bf16.msra.mxu0 %v519
  %791 = vmatpush.bf16.msra.mxu0 %v517
  %792 = vmatmul.bf16.gmra.mxu0 %v156
  %v793 = vpop.f32.mrf.mxu0
  %v794 = vadd.f32 %v780, %v793
  %v795 = vpop.f32.mrf.mxu0
  %v796 = vadd.f32 %v782, %v795
  %797 = vdwg.mxu0
  %798 = vmatpush.bf16.msra.mxu0 %v547
  %799 = vmatpush.bf16.msra.mxu0 %v545
  %800 = vmatpush.bf16.msra.mxu0 %v543
  %801 = vmatpush.bf16.msra.mxu0 %v541
  %802 = vmatpush.bf16.msra.mxu0 %v539
  %803 = vmatpush.bf16.msra.mxu0 %v537
  %804 = vmatpush.bf16.msra.mxu0 %v535
  %805 = vmatpush.bf16.msra.mxu0 %v533
  %806 = vmatmul.bf16.gmra.mxu0 %v157
  %v807 = vpop.f32.mrf.mxu0
  %v808 = vadd.f32 %v794, %v807
  %v809 = vpop.f32.mrf.mxu0
  %v810 = vadd.f32 %v796, %v809
  %811 = vdwg.mxu0
  %v812 = vld [vmem:[%s0] sm:$0xff]
  %v813 = vld [vmem:[%s0 + $0x8] sm:$0xff]
  %v814 = vld [vmem:[%s2] sm:$0xff]
  %816 = vset.pattern.permute.xlu0 0
  %817 = vperm.xlu0 %816, %v812
  %v818 = vpop.permute.xlu0 %817
  %821 = vset.pattern.permute.xlu0 0
  %822 = vperm.xlu0 %821, %v813
  %v823 = vpop.permute.xlu0 %822
  %v826 = vperm.slane %v814, 0
  %v827 = vperm.slane %v814, 4
  %v830 = vperm.slane %v826, 0
  %v831 = vperm.slane %v827, 0
  %v832 = vmul.f32 %v818, %v830
  %v833 = vmul.f32 %v818, %v831
  %v834 = vmul.f32 %v823, %v830
  %v835 = vmul.f32 %v823, %v831
  %v836 = vadd.f32 %v724, %v832
  %v837 = vadd.f32 %v808, %v833
  %v838 = vadd.f32 %v726, %v834
  %v839 = vadd.f32 %v810, %v835
  %840 = vset.pattern.permute.xlu0 1
  %841 = vperm.xlu0 %840, %v812
  %v842 = vpop.permute.xlu0 %841
  %844 = vset.pattern.permute.xlu0 1
  %845 = vperm.xlu0 %844, %v813
  %v846 = vpop.permute.xlu0 %845
  %v848 = vperm.slane %v814, 1
  %v849 = vperm.slane %v814, 5
  %v852 = vperm.slane %v848, 1
  %v853 = vperm.slane %v849, 1
  %v854 = vmul.f32 %v842, %v852
  %v855 = vmul.f32 %v842, %v853
  %v856 = vmul.f32 %v846, %v852
  %v857 = vmul.f32 %v846, %v853
  %v858 = vadd.f32 %v836, %v854
  %v859 = vadd.f32 %v837, %v855
  %v860 = vadd.f32 %v838, %v856
  %v861 = vadd.f32 %v839, %v857
  %862 = vset.pattern.permute.xlu0 2
  %863 = vperm.xlu0 %862, %v812
  %v864 = vpop.permute.xlu0 %863
  %866 = vset.pattern.permute.xlu0 2
  %867 = vperm.xlu0 %866, %v813
  %v868 = vpop.permute.xlu0 %867
  %v870 = vperm.slane %v814, 2
  %v871 = vperm.slane %v814, 6
  %v874 = vperm.slane %v870, 2
  %v875 = vperm.slane %v871, 2
  %v876 = vmul.f32 %v864, %v874
  %v877 = vmul.f32 %v864, %v875
  %v878 = vmul.f32 %v868, %v874
  %v879 = vmul.f32 %v868, %v875
  %v880 = vadd.f32 %v858, %v876
  %v881 = vadd.f32 %v859, %v877
  %v882 = vadd.f32 %v860, %v878
  %v883 = vadd.f32 %v861, %v879
  %884 = vset.pattern.permute.xlu0 3
  %885 = vperm.xlu0 %884, %v812
  %v886 = vpop.permute.xlu0 %885
  %888 = vset.pattern.permute.xlu0 3
  %889 = vperm.xlu0 %888, %v813
  %v890 = vpop.permute.xlu0 %889
  %v892 = vperm.slane %v814, 3
  %v893 = vperm.slane %v814, 7
  %v896 = vperm.slane %v892, 3
  %v897 = vperm.slane %v893, 3
  %v898 = vmul.f32 %v886, %v896
  %v899 = vmul.f32 %v886, %v897
  %v900 = vmul.f32 %v890, %v896
  %v901 = vmul.f32 %v890, %v897
  %v902 = vadd.f32 %v880, %v898
  %v903 = vadd.f32 %v881, %v899
  %v904 = vadd.f32 %v882, %v900
  %v905 = vadd.f32 %v883, %v901
  %v906 = vmax.f32 %v902, 0.0
  %v907 = vmax.f32 %v903, 0.0
  %v908 = vmax.f32 %v904, 0.0
  %v909 = vmax.f32 %v905, 0.0
  %v910 = vpack.c.bf16 %v908, %v906
  %v911 = vpack.c.bf16 %v909, %v907
  %v912 = vld [vmem:[%s5] sm:$0xf]
  %v913 = vld [vmem:[%s5 + $0x4] sm:$0xf]
  %v914 = vld [vmem:[%s5 + $0x8] sm:$0xf]
  %v915 = vld [vmem:[%s5 + $0xc] sm:$0xf]
  %v916 = vld [vmem:[%s5 + $0x10] sm:$0xf]
  %v917 = vld [vmem:[%s5 + $0x14] sm:$0xf]
  %v918 = vld [vmem:[%s5 + $0x18] sm:$0xf]
  %v919 = vld [vmem:[%s5 + $0x1c] sm:$0xf]
  %v920 = vld [vmem:[%s5 + $0x20] sm:$0xf]
  %v921 = vld [vmem:[%s5 + $0x24] sm:$0xf]
  %v922 = vld [vmem:[%s5 + $0x28] sm:$0xf]
  %v923 = vld [vmem:[%s5 + $0x2c] sm:$0xf]
  %v924 = vld [vmem:[%s5 + $0x30] sm:$0xf]
  %v925 = vld [vmem:[%s5 + $0x34] sm:$0xf]
  %v926 = vld [vmem:[%s5 + $0x38] sm:$0xf]
  %v927 = vld [vmem:[%s5 + $0x3c] sm:$0xf]
  %v928 = vld [vmem:[%s5 + $0x40] sm:$0xf]
  %v929 = vld [vmem:[%s5 + $0x44] sm:$0xf]
  %v930 = vld [vmem:[%s5 + $0x48] sm:$0xf]
  %v931 = vld [vmem:[%s5 + $0x4c] sm:$0xf]
  %v932 = vld [vmem:[%s5 + $0x50] sm:$0xf]
  %v933 = vld [vmem:[%s5 + $0x54] sm:$0xf]
  %v934 = vld [vmem:[%s5 + $0x58] sm:$0xf]
  %v935 = vld [vmem:[%s5 + $0x5c] sm:$0xf]
  %v936 = vld [vmem:[%s5 + $0x60] sm:$0xf]
  %v937 = vld [vmem:[%s5 + $0x64] sm:$0xf]
  %v938 = vld [vmem:[%s5 + $0x68] sm:$0xf]
  %v939 = vld [vmem:[%s5 + $0x6c] sm:$0xf]
  %v940 = vld [vmem:[%s5 + $0x70] sm:$0xf]
  %v941 = vld [vmem:[%s5 + $0x74] sm:$0xf]
  %v942 = vld [vmem:[%s5 + $0x78] sm:$0xf]
  %v943 = vld [vmem:[%s5 + $0x7c] sm:$0xf]
  %v944 = vld [vmem:[%s6] sm:$0x1]
  %v946 = vperm.slane %v944, 0
  %v980 = vunpack.c.l.b16 %v912
  %v981 = vunpack.c.l.b16 %v913
  %v982 = vunpack.c.l.b16 %v914
  %v983 = vunpack.c.l.b16 %v915
  %v984 = vunpack.c.l.b16 %v916
  %v985 = vunpack.c.l.b16 %v917
  %v986 = vunpack.c.l.b16 %v918
  %v987 = vunpack.c.l.b16 %v919
  %v988 = vunpack.c.l.b16 %v920
  %v989 = vunpack.c.l.b16 %v921
  %v990 = vunpack.c.l.b16 %v922
  %v991 = vunpack.c.l.b16 %v923
  %v992 = vunpack.c.l.b16 %v924
  %v993 = vunpack.c.l.b16 %v925
  %v994 = vunpack.c.l.b16 %v926
  %v995 = vunpack.c.l.b16 %v927
  %v996 = vunpack.c.l.b16 %v928
  %v997 = vunpack.c.l.b16 %v929
  %v998 = vunpack.c.l.b16 %v930
  %v999 = vunpack.c.l.b16 %v931
  %v1000 = vunpack.c.l.b16 %v932
  %v1001 = vunpack.c.l.b16 %v933
  %v1002 = vunpack.c.l.b16 %v934
  %v1003 = vunpack.c.l.b16 %v935
  %v1004 = vunpack.c.l.b16 %v936
  %v1005 = vunpack.c.l.b16 %v937
  %v1006 = vunpack.c.l.b16 %v938
  %v1007 = vunpack.c.l.b16 %v939
  %v1008 = vunpack.c.l.b16 %v940
  %v1009 = vunpack.c.l.b16 %v941
  %v1010 = vunpack.c.l.b16 %v942
  %v1011 = vunpack.c.l.b16 %v943
  %v1012 = vpack.c.b16 %v981, %v980
  %v1013 = vpack.c.b16 %v983, %v982
  %v1014 = vpack.c.b16 %v985, %v984
  %v1015 = vpack.c.b16 %v987, %v986
  %v1016 = vpack.c.b16 %v989, %v988
  %v1017 = vpack.c.b16 %v991, %v990
  %v1018 = vpack.c.b16 %v993, %v992
  %v1019 = vpack.c.b16 %v995, %v994
  %v1020 = vpack.c.b16 %v997, %v996
  %v1021 = vpack.c.b16 %v999, %v998
  %v1022 = vpack.c.b16 %v1001, %v1000
  %v1023 = vpack.c.b16 %v1003, %v1002
  %v1024 = vpack.c.b16 %v1005, %v1004
  %v1025 = vpack.c.b16 %v1007, %v1006
  %v1026 = vpack.c.b16 %v1009, %v1008
  %v1027 = vpack.c.b16 %v1011, %v1010
  %1044 = vmatpush.bf16.msra.mxu0 %v1019
  %1045 = vmatpush.bf16.msra.mxu0 %v1018
  %1046 = vmatpush.bf16.msra.mxu0 %v1017
  %1047 = vmatpush.bf16.msra.mxu0 %v1016
  %1048 = vmatpush.bf16.msra.mxu0 %v1015
  %1049 = vmatpush.bf16.msra.mxu0 %v1014
  %1050 = vmatpush.bf16.msra.mxu0 %v1013
  %1051 = vmatpush.bf16.msra.mxu0 %v1012
  %1052 = vmatmul.bf16.gmra.mxu0 %v910
  %v1053 = vpop.f32.mrf.mxu0
  %v1054 = vadd.f32 %v946, %v1053
  %v1055 = vpop.f32.mrf.mxu0
  %v1056 = vadd.f32 %v946, %v1055
  %1057 = vdwg.mxu0
  %1058 = vmatpush.bf16.msra.mxu0 %v1027
  %1059 = vmatpush.bf16.msra.mxu0 %v1026
  %1060 = vmatpush.bf16.msra.mxu0 %v1025
  %1061 = vmatpush.bf16.msra.mxu0 %v1024
  %1062 = vmatpush.bf16.msra.mxu0 %v1023
  %1063 = vmatpush.bf16.msra.mxu0 %v1022
  %1064 = vmatpush.bf16.msra.mxu0 %v1021
  %1065 = vmatpush.bf16.msra.mxu0 %v1020
  %1066 = vmatmul.bf16.gmra.mxu0 %v911
  %v1067 = vpop.f32.mrf.mxu0
  %v1068 = vadd.f32 %v1054, %v1067
  %v1069 = vpop.f32.mrf.mxu0
  %v1070 = vadd.f32 %v1056, %v1069
  %1071 = vdwg.mxu0
  %vm1072 = vcmask 23552
  %1073 = vst.msk [vmem:[%s7] sm:$0xff] %vm1072, %v1068
  %1074 = vst.msk [vmem:[%s7 + $0x8] sm:$0xff] %vm1072, %v1070
  // Predicated region
  $region30: #{hybrid_type_model.1} parent=0 // pred_check
    _
  $region31: #{hybrid_type_model.1} parent=0 // pred_check_branch
    %1076 = sbr.rel (0) target = $region33
  $region32: #{hybrid_type_model.1} parent=0 // pred_region
    _
  $region33: #{hybrid_type_model.1} parent=0 // pred_fallthru
    _
  // Predicated region
  $region34: #{hybrid_type_model.1} parent=0 // pred_check
    _
  $region35: #{hybrid_type_model.1} parent=0 // pred_check_branch
    %1078 = sbr.rel (0) target = $region37
  $region36: #{hybrid_type_model.1} parent=0 // pred_region
    _
  $region37: #{hybrid_type_model.1} parent=0 // pred_fallthru
    _

</llo_original>
